<compile_context>
chip_gen: v6e
topology: v6e:2x2x1
jax: 0.10.0
libtpu: 0.0.40
codegen_flags: <defaults>
</compile_context>

<pallas_src>
import jax
import jax.numpy as jnp
from jax.experimental import pallas as pl
from jax.experimental.pallas import tpu as pltpu

FEATURE_SZ = 50
HIDDEN = 35
OUT = 2


def _affine_kernel(x_ref, w_ref, b_ref, o_ref):
    # (TB, 50) @ (50, 2) + (1, 2)  -- single MXU pass, narrow full-dim store.
    o_ref[...] = (
        jnp.dot(x_ref[...], w_ref[...], preferred_element_type=jnp.float32)
        + b_ref[...]
    ).astype(o_ref.dtype)


def fuse_params(w1, b1, w2, b2):
    """Fuse the two bias-carrying linears into one affine op.
    Call once, outside the hot path."""
    w_eff = (w1 @ w2).astype(jnp.float32)        # (50, 2)
    b_eff = (b1 @ w2 + b2).astype(jnp.float32)   # (1, 2)
    return w_eff, b_eff


def _round_up(n, m):
    return ((n + m - 1) // m) * m


def _pick_tb(B, tb_max):
    # >= 2 grid steps whenever B > 8 (so both v7x TensorCores get work),
    # tile a multiple of 8 sublanes, capped at tb_max rows (x tile is only
    # ~tb_max*200 B of VMEM -> comfortably under scoped VMEM on v5e/v6e/v7x).
    half = _round_up(pl.cdiv(B, 2), 8)
    return max(8, min(tb_max, half))


def net_forward(x, w_eff, b_eff, *, tb=None, tb_max=4096):
    """Pallas forward of Net using pre-fused params from `fuse_params`."""
    B = x.shape[0]
    if tb is None:
        tb = _pick_tb(B, tb_max)
    else:
        tb = max(8, _round_up(min(tb, B), 8))
    grid = (pl.cdiv(B, tb),)

    cost = pl.CostEstimate(
        flops=2 * B * FEATURE_SZ * OUT,
        transcendentals=0,
        bytes_accessed=B * (FEATURE_SZ + OUT) * 4 + (FEATURE_SZ * OUT + OUT) * 4,
    )

    return pl.pallas_call(
        _affine_kernel,
        out_shape=jax.ShapeDtypeStruct((B, OUT), jnp.float32),
        grid=grid,
        in_specs=[
            pl.BlockSpec((tb, FEATURE_SZ), lambda i: (i, 0)),    # batch-tiled x
            pl.BlockSpec((FEATURE_SZ, OUT), lambda i: (0, 0)),   # fused weight (resident)
            pl.BlockSpec((1, OUT), lambda i: (0, 0)),            # fused bias (resident)
        ],
        out_specs=pl.BlockSpec((tb, OUT), lambda i: (i, 0)),     # narrow output
        compiler_params=pltpu.CompilerParams(
            dimension_semantics=("parallel",)),
        cost_estimate=cost,
    )(x, w_eff, b_eff)


def init_params(key):
    """Deterministic init mimicking nn.Linear's U(-1/sqrt(fan_in), 1/sqrt(fan_in))."""
    k1, k2, k3, k4 = jax.random.split(key, 4)
    lim1 = 1.0 / jnp.sqrt(FEATURE_SZ)
    lim2 = 1.0 / jnp.sqrt(HIDDEN)
    w1 = jax.random.uniform(k1, (FEATURE_SZ, HIDDEN), jnp.float32, -lim1, lim1)
    b1 = jax.random.uniform(k2, (1, HIDDEN), jnp.float32, -lim1, lim1)
    w2 = jax.random.uniform(k3, (HIDDEN, OUT), jnp.float32, -lim2, lim2)
    b2 = jax.random.uniform(k4, (1, OUT), jnp.float32, -lim2, lim2)
    return w1, b1, w2, b2


if __name__ == "__main__":
    key = jax.random.PRNGKey(0)
    kx, kx2, kx3, kp = jax.random.split(key, 4)

    w1, b1, w2, b2 = init_params(kp)
    w_eff, b_eff = fuse_params(w1, b1, w2, b2)   # one-time algebraic fusion

    def reference(x):
        return (x @ w1 + b1) @ w2 + b2

    # Small-batch check (single tile).
    batch = 8
    x = jax.random.normal(kx, (batch, FEATURE_SZ), jnp.float32)
    out = jax.block_until_ready(net_forward(x, w_eff, b_eff))
    assert out.shape == (batch, OUT)
    assert jnp.allclose(out, reference(x), atol=1e-5, rtol=1e-5)

    # Default tb picker -> 2 parallel grid steps (v7x megacore path).
    batch2 = 16
    x2 = jax.random.normal(kx2, (batch2, FEATURE_SZ), jnp.float32)
    out2 = jax.block_until_ready(net_forward(x2, w_eff, b_eff))
    assert out2.shape == (batch2, OUT)
    assert jnp.allclose(out2, reference(x2), atol=1e-5, rtol=1e-5)

    # Multi-tile check with a ragged last block (exercises batch tiling/masking).
    batch3 = 200
    x3 = jax.random.normal(kx3, (batch3, FEATURE_SZ), jnp.float32)
    out3 = jax.block_until_ready(net_forward(x3, w_eff, b_eff, tb=64))
    assert out3.shape == (batch3, OUT)
    assert jnp.allclose(out3, reference(x3), atol=1e-5, rtol=1e-5)

    print("KERNEL_OK")
</pallas_src>

<mosaic_0001>
module attributes {stable_mosaic.version = 11 : i64} {
  func.func @_affine_kernel(%arg0: i32, %arg1: memref<8x50xf32, #tpu.memory_space<vmem>>, %arg2: memref<50x2xf32, #tpu.memory_space<vmem>>, %arg3: memref<1x2xf32, #tpu.memory_space<vmem>>, %arg4: memref<8x2xf32, #tpu.memory_space<vmem>>) attributes {dimension_semantics = [#tpu.dimension_semantics<parallel>], iteration_bounds = array<i64: 1>, scalar_prefetch = 0 : i64, scratch_operands = 0 : i64, tpu.core_type = #tpu.core_type<tc>, window_params = [{transform_indices = @transform_0, window_bounds = array<i64: 8, 50>}, {pipeline_mode = #tpu.pipeline_mode<synchronous>, transform_indices = @transform_1, window_bounds = array<i64: 50, 2>}, {pipeline_mode = #tpu.pipeline_mode<synchronous>, transform_indices = @transform_2, window_bounds = array<i64: 1, 2>}, {transform_indices = @transform_3, window_bounds = array<i64: 8, 2>}]} {
    %c0 = arith.constant 0 : index
    %c0_0 = arith.constant 0 : index
    %0 = vector.load %arg1[%c0, %c0_0] : memref<8x50xf32, #tpu.memory_space<vmem>>, vector<8x50xf32>
    %c0_1 = arith.constant 0 : index
    %c0_2 = arith.constant 0 : index
    %1 = vector.load %arg2[%c0_1, %c0_2] : memref<50x2xf32, #tpu.memory_space<vmem>>, vector<50x2xf32>
    %cst = arith.constant dense<0.000000e+00> : vector<8x2xf32>
    %2 = tpu.matmul %0, %1, %cst {dimension_numbers = #tpu.dot_dimension_numbers<[1], [0], [0], [1], [0, 0, 1, 1], [], []>} : vector<8x50xf32>, vector<50x2xf32>, vector<8x2xf32> -> vector<8x2xf32>
    %c0_3 = arith.constant 0 : index
    %c0_4 = arith.constant 0 : index
    %3 = vector.load %arg3[%c0_3, %c0_4] : memref<1x2xf32, #tpu.memory_space<vmem>>, vector<1x2xf32>
    %4 = vector.broadcast %3 : vector<1x2xf32> to vector<8x2xf32>
    %5 = arith.addf %2, %4 : vector<8x2xf32>
    %c0_5 = arith.constant 0 : index
    %c0_6 = arith.constant 0 : index
    %6 = vector.load %arg4[%c0_5, %c0_6] : memref<8x2xf32, #tpu.memory_space<vmem>>, vector<8x2xf32>
    tpu.vector_store %arg4[%c0_5, %c0_6], %5 {strides = array<i32>} : memref<8x2xf32, #tpu.memory_space<vmem>>, vector<8x2xf32>,
    return
  }
  func.func @transform_0(%arg0: i32) -> (i32, i32) {
    %c0_i32 = arith.constant 0 : i32
    %c0_i32_0 = arith.constant 0 : i32
    return %arg0, %c0_i32 : i32, i32
  }
  func.func @transform_1(%arg0: i32) -> (i32, i32) {
    %c0_i32 = arith.constant 0 : i32
    %c0_i32_0 = arith.constant 0 : i32
    %c0_i32_1 = arith.constant 0 : i32
    return %c0_i32, %c0_i32_0 : i32, i32
  }
  func.func @transform_2(%arg0: i32) -> (i32, i32) {
    %c0_i32 = arith.constant 0 : i32
    %c0_i32_0 = arith.constant 0 : i32
    %c0_i32_1 = arith.constant 0 : i32
    return %c0_i32, %c0_i32_0 : i32, i32
  }
  func.func @transform_3(%arg0: i32) -> (i32, i32) {
    %c0_i32 = arith.constant 0 : i32
    %c0_i32_0 = arith.constant 0 : i32
    return %arg0, %c0_i32 : i32, i32
  }
}

</mosaic_0001>

<llo_original>
// kernel: tpu_custom_call.1
$region0: #{tpu_custom_call.1}
  #allocation0 [shape = 'u32[]', space=smem, size = 0x4, offset = 0x4, fixed_abs, tag = 'smem constant byte address 0x4 - core index']
  #allocation1 [shape = 'u32[144,128]{1,0:T(1,128)}', space=vmem, size = 0x12000, scoped, tag = 'internal scratch']
  %s0 = inlined_call_operand.vmem [shape: f32[8,50], index: 0, kind: input, shape index: {}]
  %s1 = inlined_call_operand.vmem [shape: f32[50,2], index: 1, kind: input, shape index: {}]
  %s2 = inlined_call_operand.vmem [shape: f32[1,2], index: 2, kind: input, shape index: {}]
  %s3 = inlined_call_operand.vmem [shape: f32[8,2], index: 3, kind: output, shape index: {}]
  %s4 = sld [smem:[#allocation0]]
  $region22: #{tpu_custom_call.1} parent=0
    _
  %s6 = ssub.s32 1, %s4
  %s7 = scalar_select 0, %s6, %s4
  // Predicated region
  $region2: #{tpu_custom_call.1} parent=0 // pred_check
    _
  $region3: #{tpu_custom_call.1} parent=0 // pred_check_branch
    %9 = sbr.rel (0) target = $region5
  $region4: #{tpu_custom_call.1} parent=0 // pred_region
    _
  $region5: #{tpu_custom_call.1} parent=0 // pred_fallthru
    _
  // Predicated region
  $region6: #{tpu_custom_call.1} parent=0 // pred_check
    _
  $region7: #{tpu_custom_call.1} parent=0 // pred_check_branch
    %11 = sbr.rel (0) target = $region9
  $region8: #{tpu_custom_call.1} parent=0 // pred_region
    _
  $region9: #{tpu_custom_call.1} parent=0 // pred_fallthru
    _
  // Predicated region
  $region10: #{tpu_custom_call.1} parent=0 // pred_check
    _
  $region11: #{tpu_custom_call.1} parent=0 // pred_check_branch
    %13 = sbr.rel (0) target = $region13
  $region12: #{tpu_custom_call.1} parent=0 // pred_region
    _
  $region13: #{tpu_custom_call.1} parent=0 // pred_fallthru
    _
  %v14 = vld [vmem:[%s0] sm:$0xff]
  %v15 = vld [vmem:[%s1] sm:$0xff]
  %v16 = vld [vmem:[%s1 + $0x8] sm:$0xff]
  %v17 = vld [vmem:[%s1 + $0x10] sm:$0xff]
  %v18 = vld [vmem:[%s1 + $0x18] sm:$0xff]
  %v19 = vld [vmem:[%s1 + $0x20] sm:$0xff]
  %v20 = vld [vmem:[%s1 + $0x28] sm:$0xff]
  %v21 = vld [vmem:[%s1 + $0x30] sm:$0x3]
  %v22 = vld [vmem:[%s2] sm:$0x1]
  %v24 = vlaneseq
  %v25 = vshrl.u32 %v24, 7
  %v26 = vsub.s32 0, %v25
  %v27 = vrot.slane %v22, %v26
  %vm29 = vcmask 408576
  %v31 = vsel %vm29, %v14, 0
  %vm33 = vcmask 1041408
  %v35 = vsel %vm33, %v21, 0
  %37 = vmatprep.subr.mxu0 0.0
  %38 = vmatpush1.msra.mxu0 0.0
  %39 = vmatprep.subr.mxu0 0.0
  %40 = vmatpush1.msra.mxu0 0.0
  %41 = vmatprep.subr.mxu0 0.0
  %42 = vmatpush1.msra.mxu0 0.0
  %43 = vmatprep.subr.mxu0 0.0
  %44 = vmatpush1.msra.mxu0 0.0
  %45 = vmatprep.subr.mxu0 0.0
  %46 = vmatpush1.msra.mxu0 0.0
  %47 = vmatprep.subr.mxu0 0.0
  %48 = vmatpush1.msra.mxu0 0.0
  %49 = vmatprep.subr.mxu0 0.0
  %50 = vmatpush1.msra.mxu0 0.0
  %51 = vmatprep.subr.mxu0 0.0
  %52 = vmatpush1.msra.mxu0 0.0
  %53 = vmatprep.subr.mxu0 0.0
  %54 = vmatpush1.msra.mxu0 0.0
  %55 = vmatprep.subr.mxu0 0.0
  %56 = vmatpush1.msra.mxu0 %v35
  %57 = vmatprep.subr.mxu0 0.0
  %58 = vmatpush1.msra.mxu0 %v20
  %59 = vmatprep.subr.mxu0 0.0
  %60 = vmatpush1.msra.mxu0 %v19
  %61 = vmatprep.subr.mxu0 0.0
  %62 = vmatpush1.msra.mxu0 %v18
  %63 = vmatprep.subr.mxu0 0.0
  %64 = vmatpush1.msra.mxu0 %v17
  %65 = vmatprep.subr.mxu0 0.0
  %66 = vmatpush1.msra.mxu0 %v16
  %67 = vmatprep.subr.mxu0 0.0
  %68 = vmatpush1.msra.mxu0 %v15
  %69 = vmatprep.subr.mxu0 0.0
  %70 = vmatpush2.msra.mxu0 0.0
  %71 = vmatprep.subr.mxu0 0.0
  %72 = vmatpush2.msra.mxu0 0.0
  %73 = vmatprep.subr.mxu0 0.0
  %74 = vmatpush2.msra.mxu0 0.0
  %75 = vmatprep.subr.mxu0 0.0
  %76 = vmatpush2.msra.mxu0 0.0
  %77 = vmatprep.subr.mxu0 0.0
  %78 = vmatpush2.msra.mxu0 0.0
  %79 = vmatprep.subr.mxu0 0.0
  %80 = vmatpush2.msra.mxu0 0.0
  %81 = vmatprep.subr.mxu0 0.0
  %82 = vmatpush2.msra.mxu0 0.0
  %83 = vmatprep.subr.mxu0 0.0
  %84 = vmatpush2.msra.mxu0 0.0
  %85 = vmatprep.subr.mxu0 0.0
  %86 = vmatpush2.msra.mxu0 0.0
  %87 = vmatprep.subr.mxu0 0.0
  %88 = vmatpush2.msra.mxu0 0.0
  %89 = vmatprep.subr.mxu0 0.0
  %90 = vmatpush2.msra.mxu0 0.0
  %91 = vmatprep.subr.mxu0 0.0
  %92 = vmatpush2.msra.mxu0 0.0
  %93 = vmatprep.subr.mxu0 0.0
  %94 = vmatpush2.msra.mxu0 0.0
  %95 = vmatprep.subr.mxu0 0.0
  %96 = vmatpush2.msra.mxu0 0.0
  %97 = vmatprep.subr.mxu0 0.0
  %98 = vmatpush2.msra.mxu0 0.0
  %99 = vmatprep.subr.mxu0 0.0
  %100 = vmatpush2.msra.mxu0 0.0
  %101 = vmatprep.mubr.f32.mxu0 0.0
  %102 = vmatmul.mubr.f32.gmra.mxu0 %v31
  %v103 = vpop.f32.mrf.mxu0
  %v104 = vadd.f32 %v27, %v103
  %v105 = vpop.f32.mrf.mxu0
  %106 = vdwg.mxu0
  %vm107 = vcmask 15360
  %108 = vst.msk [vmem:[%s3] sm:$0xff] %vm107, %v104
  // Predicated region
  $region14: #{tpu_custom_call.1} parent=0 // pred_check
    _
  $region15: #{tpu_custom_call.1} parent=0 // pred_check_branch
    %110 = sbr.rel (0) target = $region17
  $region16: #{tpu_custom_call.1} parent=0 // pred_region
    _
  $region17: #{tpu_custom_call.1} parent=0 // pred_fallthru
    _
  // Predicated region
  $region18: #{tpu_custom_call.1} parent=0 // pred_check
    _
  $region19: #{tpu_custom_call.1} parent=0 // pred_check_branch
    %112 = sbr.rel (0) target = $region21
  $region20: #{tpu_custom_call.1} parent=0 // pred_region
    _
  $region21: #{tpu_custom_call.1} parent=0 // pred_fallthru
    _

</llo_original>
